<compile_context>
chip_gen: v6e
topology: v6e:2x2x1
jax: 0.10.0
libtpu: 0.0.40
codegen_flags: <defaults>
</compile_context>

<pallas_src>
import functools

import jax
import jax.numpy as jnp
from jax import lax
from jax.experimental import pallas as pl
from jax.experimental.pallas import tpu as pltpu

_LN_EPS = 1e-5                 # torch.nn.LayerNorm default
_MXU_DTYPE = jnp.bfloat16      # MXU input dtype; accumulation stays f32


def _layernorm(z, g, b):
    mu = jnp.mean(z, axis=-1, keepdims=True)
    zc = z - mu
    var = jnp.mean(zc * zc, axis=-1, keepdims=True)
    return zc * lax.rsqrt(var + _LN_EPS) * g + b


def _floordiv(a, n):
    """a // n for non-negative int32 a; shift when n is a power of two."""
    if n & (n - 1) == 0:
        return lax.shift_right_logical(a, n.bit_length() - 1)
    return a // n


def _mod(a, n):
    """a % n for non-negative int32 a; bitwise-and when n is a power of two."""
    if n & (n - 1) == 0:
        return jnp.bitwise_and(a, n - 1)
    return a % n


def _block_kernel(lengths_ref, x_ref, wqkv_ref, wproj_ref, wfc1_ref, wfc2_ref,
                  small_ref, out_ref, *, B, T, C, NH, D):
    BT = B * T
    R = NH * BT            # rows of the head-block-diagonal K/V slabs == score cols
    neg_inf = jnp.float32(-jnp.inf)

    x = x_ref[...]                                           # (BT, C) f32

    # ---- small params: one packed VMEM vreg (one DMA instead of seven) ----
    ln1_g = small_ref[0:1, :C]
    ln1_b = small_ref[1:2, :C]
    b_proj = small_ref[2:3, :C]
    ln2_g = small_ref[3:4, :C]
    ln2_b = small_ref[4:5, :C]
    b_fc2 = small_ref[5:6, :C]
    b_fc1 = small_ref[6:7, :]                                # (1, 4C)

    # ---------------- LayerNorm 1 (f32 elementwise) ----------------
    h1 = _layernorm(x, ln1_g, ln1_b)

    # ---- fused QKV; 1/sqrt(head_size) already folded into Q columns ----
    qkv = jnp.dot(h1.astype(_MXU_DTYPE), wqkv_ref[...],
                  preferred_element_type=jnp.float32)        # (BT, 3C) f32
    q = qkv[:, 0 * C:1 * C]
    k = qkv[:, 1 * C:2 * C]
    v = qkv[:, 2 * C:3 * C]

    # ---- head-block-diagonal K / V slabs (heads stay packed along lanes) ----
    # Row r = h*BT + b*T + j keeps only head h's D lanes of key/value row (b, j).
    rr = lax.broadcasted_iota(jnp.int32, (R, C), 0)
    cc = lax.broadcasted_iota(jnp.int32, (R, C), 1)
    blk = (_floordiv(rr, BT) == _floordiv(cc, D)).astype(jnp.float32)   # (R, C)
    krep = jnp.concatenate([k] * NH, axis=0)                 # (R, C): row r -> k[r % BT]
    vrep = jnp.concatenate([v] * NH, axis=0)
    kbig = (krep * blk).astype(_MXU_DTYPE)
    vbig = (vrep * blk).astype(_MXU_DTYPE)
    blk_bf = blk.astype(_MXU_DTYPE)

    # ---- scores for ALL (batch, head) pairs in one matmul ----
    s = lax.dot_general(q.astype(_MXU_DTYPE), kbig, (((1,), (1,)), ((), ())),
                        preferred_element_type=jnp.float32)  # (BT, R) f32

    # ---- causal + length mask; cross-batch columns invalid ----
    row = lax.broadcasted_iota(jnp.int32, (BT, R), 0)        # = b*T + i
    col = lax.broadcasted_iota(jnp.int32, (BT, R), 1)        # = h*BT + b'*T + j
    i_idx = _mod(row, T)
    b_row = _floordiv(row, T)
    j_idx = _mod(col, T)
    b_col = _mod(_floordiv(col, T), B)
    lens = jnp.zeros((BT, R), jnp.int32)
    for b in range(B):                                       # B tiny & static
        lens = jnp.where(b_row == b, lengths_ref[b], lens)
    valid = (b_col == b_row) & (
        ((j_idx <= i_idx) & (i_idx < lens) & (j_idx < lens)) | (j_idx == i_idx))
    s = jnp.where(valid, s, neg_inf)

    # ---- softmax: shared per-row max (constant within each head's group, so
    # mathematically exact; per-head score spreads here are far from underflow)
    m = jnp.max(s, axis=-1, keepdims=True)
    e = jnp.exp(s - m)                                       # masked entries -> 0
    e_bf = e.astype(_MXU_DTYPE)
    # Per-(row, head) denominators, already broadcast across that head's lanes.
    denom = jnp.dot(e_bf, blk_bf, preferred_element_type=jnp.float32)   # (BT, C)
    o_un = jnp.dot(e_bf, vbig, preferred_element_type=jnp.float32)      # (BT, C)
    att = o_un * pl.reciprocal(denom, approx=True)           # heads lane-packed

    # ---- output projection + residual 1 ----
    y = jnp.dot(att.astype(_MXU_DTYPE), wproj_ref[...],
                preferred_element_type=jnp.float32) + b_proj
    x = x + y

    # ---- LayerNorm 2 + FeedForward + residual 2 ----
    h2 = _layernorm(x, ln2_g, ln2_b)
    f = jnp.dot(h2.astype(_MXU_DTYPE), wfc1_ref[...],
                preferred_element_type=jnp.float32) + b_fc1
    f = jnp.maximum(f, 0.0)
    f = jnp.dot(f.astype(_MXU_DTYPE), wfc2_ref[...],
                preferred_element_type=jnp.float32) + b_fc2

    out_ref[...] = (x + f).astype(out_ref.dtype)


def prepare_block_params(params):
    """One-time weight prep: QKV fusion, scale fold, bf16 casts, small-param pack."""
    num_heads = params["num_heads"]
    C = params["w_proj"].shape[0]
    D = C // num_heads
    scale = float(D) ** -0.5
    wq_all = jnp.concatenate(params["wq"], axis=1) * scale    # fold 1/sqrt(D) into Q
    wk_all = jnp.concatenate(params["wk"], axis=1)
    wv_all = jnp.concatenate(params["wv"], axis=1)
    w_qkv = jnp.concatenate([wq_all, wk_all, wv_all], axis=1).astype(_MXU_DTYPE)

    small = jnp.zeros((8, 4 * C), jnp.float32)
    small = small.at[0, :C].set(params["ln1_g"])
    small = small.at[1, :C].set(params["ln1_b"])
    small = small.at[2, :C].set(params["b_proj"])
    small = small.at[3, :C].set(params["ln2_g"])
    small = small.at[4, :C].set(params["ln2_b"])
    small = small.at[5, :C].set(params["b_fc2"])
    small = small.at[6, :].set(params["b_fc1"])

    return {
        "num_heads": num_heads,
        "w_qkv": w_qkv,
        "w_proj": params["w_proj"].astype(_MXU_DTYPE),
        "w_fc1": params["w_fc1"].astype(_MXU_DTYPE),
        "w_fc2": params["w_fc2"].astype(_MXU_DTYPE),
        "small": small,
    }


def block_forward(x, prep, lengths=None):
    """x: (B, T, C) f32.  prep: output of prepare_block_params.  lengths: (B,) int."""
    B, T, C = x.shape
    NH = prep["num_heads"]
    D = C // NH
    if lengths is None:
        lengths = jnp.full((B,), T, dtype=jnp.int32)
    lengths = lengths.astype(jnp.int32)

    kernel = functools.partial(_block_kernel, B=B, T=T, C=C, NH=NH, D=D)
    vmem = pl.BlockSpec(memory_space=pltpu.MemorySpace.VMEM)
    smem = pl.BlockSpec(memory_space=pltpu.MemorySpace.SMEM)

    out2d = pl.pallas_call(
        kernel,
        out_shape=jax.ShapeDtypeStruct((B * T, C), x.dtype),
        in_specs=[smem] + [vmem] * 6,
        out_specs=vmem,
    )(lengths,
      x.reshape(B * T, C),
      prep["w_qkv"], prep["w_proj"], prep["w_fc1"], prep["w_fc2"], prep["small"])
    return out2d.reshape(B, T, C)


def block_reference(x, params, lengths):
    """Pure-JAX f32 reference mirroring the PyTorch Block forward (eval mode)."""
    B, T, C = x.shape
    num_heads = params["num_heads"]
    H = C // num_heads

    def ln(z, g, b):
        mu = z.mean(-1, keepdims=True)
        var = ((z - mu) ** 2).mean(-1, keepdims=True)
        return (z - mu) / jnp.sqrt(var + _LN_EPS) * g + b

    h = ln(x, params["ln1_g"], params["ln1_b"])
    causal = jnp.tril(jnp.ones((T, T), dtype=bool))
    lm = jnp.arange(T)[None, :] < lengths[:, None]
    m = lm[:, None, :] & lm[:, :, None]
    m = m | jnp.eye(T, dtype=bool)[None]

    outs = []
    for wq, wk, wv in zip(params["wq"], params["wk"], params["wv"]):
        q, k, v = h @ wq, h @ wk, h @ wv
        w = q @ jnp.swapaxes(k, -2, -1)
        w = jnp.where(causal[None], w, -jnp.inf)
        w = jnp.where(m, w, -jnp.inf)
        w = w * float(H) ** -0.5
        outs.append(jax.nn.softmax(w, axis=-1) @ v)
    att = jnp.concatenate(outs, axis=-1) @ params["w_proj"] + params["b_proj"]
    x = x + att
    h2 = ln(x, params["ln2_g"], params["ln2_b"])
    f = jnp.maximum(h2 @ params["w_fc1"] + params["b_fc1"], 0.0)
    f = f @ params["w_fc2"] + params["b_fc2"]
    return x + f


def init_block_params(key, n_embd, num_heads):
    C = n_embd
    H = C // num_heads
    ks = jax.random.split(key, 3 * num_heads + 10)
    it = iter(ks)
    bnd_c = 1.0 / (C ** 0.5)
    bnd_4c = 1.0 / ((4 * C) ** 0.5)

    def u(k, shape, bnd):
        return jax.random.uniform(k, shape, minval=-bnd, maxval=bnd, dtype=jnp.float32)

    params = {
        "num_heads": num_heads,
        # per-head Linear(n_embd, head_size, bias=False), weights stored as W^T = (C, H)
        "wq": [u(next(it), (C, H), bnd_c) for _ in range(num_heads)],
        "wk": [u(next(it), (C, H), bnd_c) for _ in range(num_heads)],
        "wv": [u(next(it), (C, H), bnd_c) for _ in range(num_heads)],
        "w_proj": u(next(it), (C, C), bnd_c),
        "b_proj": u(next(it), (C,), bnd_c),
        "w_fc1": u(next(it), (C, 4 * C), bnd_c),
        "b_fc1": u(next(it), (4 * C,), bnd_c),
        "w_fc2": u(next(it), (4 * C, C), bnd_4c),
        "b_fc2": u(next(it), (C,), bnd_4c),
        # LayerNorm affine params (randomized a bit so the test exercises them)
        "ln1_g": 1.0 + 0.1 * jax.random.normal(next(it), (C,), dtype=jnp.float32),
        "ln1_b": 0.1 * jax.random.normal(next(it), (C,), dtype=jnp.float32),
        "ln2_g": 1.0 + 0.1 * jax.random.normal(next(it), (C,), dtype=jnp.float32),
        "ln2_b": 0.1 * jax.random.normal(next(it), (C,), dtype=jnp.float32),
    }
    return params


if __name__ == "__main__":
    # Block hyper-params: n_embd=32, num_heads=4 (head_size=8), block_size=T=8, dropout=0.0
    B, T, C, NH = 2, 8, 32, 4

    key = jax.random.PRNGKey(0)
    kx, kp = jax.random.split(key)
    x = jax.random.normal(kx, (B, T, C), dtype=jnp.float32)
    params = init_block_params(kp, C, NH)
    prep = prepare_block_params(params)        # one-time weight prep (amortized)
    lengths = jnp.array([T, 5], dtype=jnp.int32)

    out = jax.block_until_ready(block_forward(x, prep, lengths))
    ref = jax.block_until_ready(block_reference(x, params, lengths))

    assert out.shape == (B, T, C), out.shape
    # bf16 MXU inputs + approx softmax reciprocal (per perf review) => relaxed tolerance
    # vs. the pure-f32 reference.
    err = float(jnp.max(jnp.abs(out - ref)))
    assert jnp.allclose(out, ref, atol=5e-2, rtol=5e-2), f"max abs diff {err}"
    print("KERNEL_OK")
</pallas_src>

<mosaic_0001>
module attributes {stable_mosaic.version = 11 : i64} {
  func.func @_block_kernel(%arg0: memref<2xi32, #tpu.memory_space<smem>>, %arg1: memref<16x32xf32, #tpu.memory_space<vmem>>, %arg2: memref<32x96xbf16, #tpu.memory_space<vmem>>, %arg3: memref<32x32xbf16, #tpu.memory_space<vmem>>, %arg4: memref<32x128xbf16, #tpu.memory_space<vmem>>, %arg5: memref<128x32xbf16, #tpu.memory_space<vmem>>, %arg6: memref<8x128xf32, #tpu.memory_space<vmem>>, %arg7: memref<16x32xf32, #tpu.memory_space<vmem>>) attributes {dimension_semantics = [], scalar_prefetch = 0 : i64, scratch_operands = 0 : i64, tpu.core_type = #tpu.core_type<tc>} {
    %c0 = arith.constant 0 : index
    %c0_0 = arith.constant 0 : index
    %0 = vector.load %arg1[%c0, %c0_0] : memref<16x32xf32, #tpu.memory_space<vmem>>, vector<16x32xf32>
    %c0_1 = arith.constant 0 : index
    %c0_2 = arith.constant 0 : index
    %1 = vector.load %arg6[%c0_1, %c0_2] : memref<8x128xf32, #tpu.memory_space<vmem>>, vector<1x32xf32>
    %c1 = arith.constant 1 : index
    %c0_3 = arith.constant 0 : index
    %2 = vector.load %arg6[%c1, %c0_3] : memref<8x128xf32, #tpu.memory_space<vmem>>, vector<1x32xf32>
    %c2 = arith.constant 2 : index
    %c0_4 = arith.constant 0 : index
    %3 = vector.load %arg6[%c2, %c0_4] : memref<8x128xf32, #tpu.memory_space<vmem>>, vector<1x32xf32>
    %c3 = arith.constant 3 : index
    %c0_5 = arith.constant 0 : index
    %4 = vector.load %arg6[%c3, %c0_5] : memref<8x128xf32, #tpu.memory_space<vmem>>, vector<1x32xf32>
    %c4 = arith.constant 4 : index
    %c0_6 = arith.constant 0 : index
    %5 = vector.load %arg6[%c4, %c0_6] : memref<8x128xf32, #tpu.memory_space<vmem>>, vector<1x32xf32>
    %c5 = arith.constant 5 : index
    %c0_7 = arith.constant 0 : index
    %6 = vector.load %arg6[%c5, %c0_7] : memref<8x128xf32, #tpu.memory_space<vmem>>, vector<1x32xf32>
    %c6 = arith.constant 6 : index
    %c0_8 = arith.constant 0 : index
    %7 = vector.load %arg6[%c6, %c0_8] : memref<8x128xf32, #tpu.memory_space<vmem>>, vector<1x128xf32>
    %cst = arith.constant dense<0.000000e+00> : vector<16xf32>
    %8 = vector.multi_reduction <add>, %0, %cst [1] : vector<16x32xf32> to vector<16xf32>
    %9 = vector.shape_cast %8 : vector<16xf32> to vector<16x1xf32>
    %cst_9 = arith.constant 3.200000e+01 : f32
    %10 = vector.broadcast %cst_9 : f32 to vector<16x1xf32>
    %11 = arith.divf %9, %10 : vector<16x1xf32>
    %12 = vector.broadcast %11 : vector<16x1xf32> to vector<16x32xf32>
    %13 = arith.subf %0, %12 : vector<16x32xf32>
    %14 = arith.mulf %13, %13 : vector<16x32xf32>
    %cst_10 = arith.constant dense<0.000000e+00> : vector<16xf32>
    %15 = vector.multi_reduction <add>, %14, %cst_10 [1] : vector<16x32xf32> to vector<16xf32>
    %16 = vector.shape_cast %15 : vector<16xf32> to vector<16x1xf32>
    %cst_11 = arith.constant 3.200000e+01 : f32
    %17 = vector.broadcast %cst_11 : f32 to vector<16x1xf32>
    %18 = arith.divf %16, %17 : vector<16x1xf32>
    %cst_12 = arith.constant 9.99999974E-6 : f32
    %19 = vector.broadcast %cst_12 : f32 to vector<16x1xf32>
    %20 = arith.addf %18, %19 : vector<16x1xf32>
    %21 = math.rsqrt %20 : vector<16x1xf32>
    %22 = vector.broadcast %21 : vector<16x1xf32> to vector<16x32xf32>
    %23 = arith.mulf %13, %22 : vector<16x32xf32>
    %24 = vector.broadcast %1 : vector<1x32xf32> to vector<16x32xf32>
    %25 = arith.mulf %23, %24 : vector<16x32xf32>
    %26 = vector.broadcast %2 : vector<1x32xf32> to vector<16x32xf32>
    %27 = arith.addf %25, %26 : vector<16x32xf32>
    %28 = arith.truncf %27 : vector<16x32xf32> to vector<16x32xbf16>
    %c0_13 = arith.constant 0 : index
    %c0_14 = arith.constant 0 : index
    %29 = vector.load %arg2[%c0_13, %c0_14] : memref<32x96xbf16, #tpu.memory_space<vmem>>, vector<32x96xbf16>
    %cst_15 = arith.constant dense<0.000000e+00> : vector<16x96xf32>
    %30 = tpu.matmul %28, %29, %cst_15 {dimension_numbers = #tpu.dot_dimension_numbers<[1], [0], [0], [1], [0, 0, 1, 1], [], []>} : vector<16x32xbf16>, vector<32x96xbf16>, vector<16x96xf32> -> vector<16x96xf32>
    %31 = vector.extract_strided_slice %30 {offsets = [0, 0], sizes = [16, 32], strides = [1, 1]} : vector<16x96xf32> to vector<16x32xf32>
    %32 = vector.extract_strided_slice %30 {offsets = [0, 32], sizes = [16, 32], strides = [1, 1]} : vector<16x96xf32> to vector<16x32xf32>
    %33 = vector.extract_strided_slice %30 {offsets = [0, 64], sizes = [16, 32], strides = [1, 1]} : vector<16x96xf32> to vector<16x32xf32>
    %34 = tpu.iota {dimensions = array<i32: 0>} : vector<64x32xi32>
    %35 = tpu.iota {dimensions = array<i32: 1>} : vector<64x32xi32>
    %c4_i32 = arith.constant 4 : i32
    %36 = vector.broadcast %c4_i32 : i32 to vector<64x32xi32>
    %37 = arith.shrui %34, %36 : vector<64x32xi32>
    %c3_i32 = arith.constant 3 : i32
    %38 = vector.broadcast %c3_i32 : i32 to vector<64x32xi32>
    %39 = arith.shrui %35, %38 : vector<64x32xi32>
    %40 = arith.cmpi eq, %37, %39 : vector<64x32xi32>
    %41 = arith.extui %40 : vector<64x32xi1> to vector<64x32xi32>
    %42 = arith.sitofp %41 : vector<64x32xi32> to vector<64x32xf32>
    %43 = tpu.concatenate %32, %32, %32, %32 in 0 : vector<16x32xf32>, vector<16x32xf32>, vector<16x32xf32>, vector<16x32xf32> -> vector<64x32xf32>
    %44 = tpu.concatenate %33, %33, %33, %33 in 0 : vector<16x32xf32>, vector<16x32xf32>, vector<16x32xf32>, vector<16x32xf32> -> vector<64x32xf32>
    %45 = arith.mulf %43, %42 : vector<64x32xf32>
    %46 = arith.truncf %45 : vector<64x32xf32> to vector<64x32xbf16>
    %47 = arith.mulf %44, %42 : vector<64x32xf32>
    %48 = arith.truncf %47 : vector<64x32xf32> to vector<64x32xbf16>
    %49 = arith.truncf %42 : vector<64x32xf32> to vector<64x32xbf16>
    %50 = arith.truncf %31 : vector<16x32xf32> to vector<16x32xbf16>
    %cst_16 = arith.constant dense<0.000000e+00> : vector<16x64xf32>
    %51 = tpu.matmul %50, %46, %cst_16 {dimension_numbers = #tpu.dot_dimension_numbers<[1], [1], [0], [0], [0, 0, 1, 0], [], []>} : vector<16x32xbf16>, vector<64x32xbf16>, vector<16x64xf32> -> vector<16x64xf32>
    %52 = tpu.iota {dimensions = array<i32: 0>} : vector<16x64xi32>
    %53 = tpu.iota {dimensions = array<i32: 1>} : vector<16x64xi32>
    %c7_i32 = arith.constant 7 : i32
    %54 = vector.broadcast %c7_i32 : i32 to vector<16x64xi32>
    %55 = arith.andi %52, %54 : vector<16x64xi32>
    %c3_i32_17 = arith.constant 3 : i32
    %56 = vector.broadcast %c3_i32_17 : i32 to vector<16x64xi32>
    %57 = arith.shrui %52, %56 : vector<16x64xi32>
    %c7_i32_18 = arith.constant 7 : i32
    %58 = vector.broadcast %c7_i32_18 : i32 to vector<16x64xi32>
    %59 = arith.andi %53, %58 : vector<16x64xi32>
    %c3_i32_19 = arith.constant 3 : i32
    %60 = vector.broadcast %c3_i32_19 : i32 to vector<16x64xi32>
    %61 = arith.shrui %53, %60 : vector<16x64xi32>
    %c1_i32 = arith.constant 1 : i32
    %62 = vector.broadcast %c1_i32 : i32 to vector<16x64xi32>
    %63 = arith.andi %61, %62 : vector<16x64xi32>
    %c0_i32 = arith.constant 0 : i32
    %64 = vector.broadcast %c0_i32 : i32 to vector<16x64xi32>
    %c0_i32_20 = arith.constant 0 : i32
    %65 = vector.broadcast %c0_i32_20 : i32 to vector<16x64xi32>
    %66 = arith.cmpi eq, %57, %65 : vector<16x64xi32>
    %c0_21 = arith.constant 0 : index
    %67 = memref.load %arg0[%c0_21] : memref<2xi32, #tpu.memory_space<smem>>
    %68 = vector.broadcast %67 : i32 to vector<16x64xi32>
    %69 = arith.select %66, %68, %64 : vector<16x64xi1>, vector<16x64xi32>
    %c1_i32_22 = arith.constant 1 : i32
    %70 = vector.broadcast %c1_i32_22 : i32 to vector<16x64xi32>
    %71 = arith.cmpi eq, %57, %70 : vector<16x64xi32>
    %c1_23 = arith.constant 1 : index
    %72 = memref.load %arg0[%c1_23] : memref<2xi32, #tpu.memory_space<smem>>
    %73 = vector.broadcast %72 : i32 to vector<16x64xi32>
    %74 = arith.select %71, %73, %69 : vector<16x64xi1>, vector<16x64xi32>
    %75 = arith.cmpi eq, %63, %57 : vector<16x64xi32>
    %76 = arith.cmpi sle, %59, %55 : vector<16x64xi32>
    %77 = arith.cmpi slt, %55, %74 : vector<16x64xi32>
    %78 = arith.andi %76, %77 : vector<16x64xi1>
    %79 = arith.cmpi slt, %59, %74 : vector<16x64xi32>
    %80 = arith.andi %78, %79 : vector<16x64xi1>
    %81 = arith.cmpi eq, %59, %55 : vector<16x64xi32>
    %82 = arith.ori %80, %81 : vector<16x64xi1>
    %83 = arith.andi %75, %82 : vector<16x64xi1>
    %cst_24 = arith.constant 0xFF800000 : f32
    %84 = vector.broadcast %cst_24 : f32 to vector<16x64xf32>
    %85 = arith.select %83, %51, %84 : vector<16x64xi1>, vector<16x64xf32>
    %cst_25 = arith.constant dense<0xFF800000> : vector<16xf32>
    %86 = vector.multi_reduction <maximumf>, %85, %cst_25 [1] : vector<16x64xf32> to vector<16xf32>
    %87 = vector.shape_cast %86 : vector<16xf32> to vector<16x1xf32>
    %88 = vector.broadcast %87 : vector<16x1xf32> to vector<16x64xf32>
    %89 = arith.subf %85, %88 : vector<16x64xf32>
    %90 = math.exp %89 : vector<16x64xf32>
    %91 = arith.truncf %90 : vector<16x64xf32> to vector<16x64xbf16>
    %cst_26 = arith.constant dense<0.000000e+00> : vector<16x32xf32>
    %92 = tpu.matmul %91, %49, %cst_26 {dimension_numbers = #tpu.dot_dimension_numbers<[1], [0], [0], [1], [0, 0, 1, 1], [], []>} : vector<16x64xbf16>, vector<64x32xbf16>, vector<16x32xf32> -> vector<16x32xf32>
    %cst_27 = arith.constant dense<0.000000e+00> : vector<16x32xf32>
    %93 = tpu.matmul %91, %48, %cst_27 {dimension_numbers = #tpu.dot_dimension_numbers<[1], [0], [0], [1], [0, 0, 1, 1], [], []>} : vector<16x64xbf16>, vector<64x32xbf16>, vector<16x32xf32> -> vector<16x32xf32>
    %94 = tpu.reciprocal %92 {approx = true} : vector<16x32xf32> -> vector<16x32xf32>
    %95 = arith.mulf %93, %94 : vector<16x32xf32>
    %96 = arith.truncf %95 : vector<16x32xf32> to vector<16x32xbf16>
    %c0_28 = arith.constant 0 : index
    %c0_29 = arith.constant 0 : index
    %97 = vector.load %arg3[%c0_28, %c0_29] : memref<32x32xbf16, #tpu.memory_space<vmem>>, vector<32x32xbf16>
    %cst_30 = arith.constant dense<0.000000e+00> : vector<16x32xf32>
    %98 = tpu.matmul %96, %97, %cst_30 {dimension_numbers = #tpu.dot_dimension_numbers<[1], [0], [0], [1], [0, 0, 1, 1], [], []>} : vector<16x32xbf16>, vector<32x32xbf16>, vector<16x32xf32> -> vector<16x32xf32>
    %99 = vector.broadcast %3 : vector<1x32xf32> to vector<16x32xf32>
    %100 = arith.addf %98, %99 : vector<16x32xf32>
    %101 = arith.addf %0, %100 : vector<16x32xf32>
    %cst_31 = arith.constant dense<0.000000e+00> : vector<16xf32>
    %102 = vector.multi_reduction <add>, %101, %cst_31 [1] : vector<16x32xf32> to vector<16xf32>
    %103 = vector.shape_cast %102 : vector<16xf32> to vector<16x1xf32>
    %cst_32 = arith.constant 3.200000e+01 : f32
    %104 = vector.broadcast %cst_32 : f32 to vector<16x1xf32>
    %105 = arith.divf %103, %104 : vector<16x1xf32>
    %106 = vector.broadcast %105 : vector<16x1xf32> to vector<16x32xf32>
    %107 = arith.subf %101, %106 : vector<16x32xf32>
    %108 = arith.mulf %107, %107 : vector<16x32xf32>
    %cst_33 = arith.constant dense<0.000000e+00> : vector<16xf32>
    %109 = vector.multi_reduction <add>, %108, %cst_33 [1] : vector<16x32xf32> to vector<16xf32>
    %110 = vector.shape_cast %109 : vector<16xf32> to vector<16x1xf32>
    %cst_34 = arith.constant 3.200000e+01 : f32
    %111 = vector.broadcast %cst_34 : f32 to vector<16x1xf32>
    %112 = arith.divf %110, %111 : vector<16x1xf32>
    %cst_35 = arith.constant 9.99999974E-6 : f32
    %113 = vector.broadcast %cst_35 : f32 to vector<16x1xf32>
    %114 = arith.addf %112, %113 : vector<16x1xf32>
    %115 = math.rsqrt %114 : vector<16x1xf32>
    %116 = vector.broadcast %115 : vector<16x1xf32> to vector<16x32xf32>
    %117 = arith.mulf %107, %116 : vector<16x32xf32>
    %118 = vector.broadcast %4 : vector<1x32xf32> to vector<16x32xf32>
    %119 = arith.mulf %117, %118 : vector<16x32xf32>
    %120 = vector.broadcast %5 : vector<1x32xf32> to vector<16x32xf32>
    %121 = arith.addf %119, %120 : vector<16x32xf32>
    %122 = arith.truncf %121 : vector<16x32xf32> to vector<16x32xbf16>
    %c0_36 = arith.constant 0 : index
    %c0_37 = arith.constant 0 : index
    %123 = vector.load %arg4[%c0_36, %c0_37] : memref<32x128xbf16, #tpu.memory_space<vmem>>, vector<32x128xbf16>
    %cst_38 = arith.constant dense<0.000000e+00> : vector<16x128xf32>
    %124 = tpu.matmul %122, %123, %cst_38 {dimension_numbers = #tpu.dot_dimension_numbers<[1], [0], [0], [1], [0, 0, 1, 1], [], []>} : vector<16x32xbf16>, vector<32x128xbf16>, vector<16x128xf32> -> vector<16x128xf32>
    %125 = vector.broadcast %7 : vector<1x128xf32> to vector<16x128xf32>
    %126 = arith.addf %124, %125 : vector<16x128xf32>
    %cst_39 = arith.constant 0.000000e+00 : f32
    %127 = vector.broadcast %cst_39 : f32 to vector<16x128xf32>
    %128 = arith.maximumf %126, %127 : vector<16x128xf32>
    %129 = arith.truncf %128 : vector<16x128xf32> to vector<16x128xbf16>
    %c0_40 = arith.constant 0 : index
    %c0_41 = arith.constant 0 : index
    %130 = vector.load %arg5[%c0_40, %c0_41] : memref<128x32xbf16, #tpu.memory_space<vmem>>, vector<128x32xbf16>
    %cst_42 = arith.constant dense<0.000000e+00> : vector<16x32xf32>
    %131 = tpu.matmul %129, %130, %cst_42 {dimension_numbers = #tpu.dot_dimension_numbers<[1], [0], [0], [1], [0, 0, 1, 1], [], []>} : vector<16x128xbf16>, vector<128x32xbf16>, vector<16x32xf32> -> vector<16x32xf32>
    %132 = vector.broadcast %6 : vector<1x32xf32> to vector<16x32xf32>
    %133 = arith.addf %131, %132 : vector<16x32xf32>
    %134 = arith.addf %101, %133 : vector<16x32xf32>
    %c0_43 = arith.constant 0 : index
    %c0_44 = arith.constant 0 : index
    %135 = vector.load %arg7[%c0_43, %c0_44] : memref<16x32xf32, #tpu.memory_space<vmem>>, vector<16x32xf32>
    tpu.vector_store %arg7[%c0_43, %c0_44], %134 {strides = array<i32>} : memref<16x32xf32, #tpu.memory_space<vmem>>, vector<16x32xf32>,
    return
  }
}

</mosaic_0001>

<llo_original>
// kernel: tpu_custom_call.1
$region0: #{tpu_custom_call.1}
  #allocation0 [shape = 'u32[]', space=smem, size = 0x4, offset = 0x4, fixed_abs, tag = 'smem constant byte address 0x4 - core index']
  #allocation1 [shape = 'u32[144,128]{1,0:T(1,128)}', space=vmem, size = 0x12000, scoped, tag = 'internal scratch']
  %s0 = inlined_call_operand.vmem [shape: s32[2], index: 0, kind: input, shape index: {}]
  %s1 = inlined_call_operand.vmem [shape: f32[16,32], index: 1, kind: input, shape index: {}]
  %s2 = inlined_call_operand.vmem [shape: bf16[32,96], index: 2, kind: input, shape index: {}]
  %s3 = inlined_call_operand.vmem [shape: bf16[32,32], index: 3, kind: input, shape index: {}]
  %s4 = inlined_call_operand.vmem [shape: bf16[32,128], index: 4, kind: input, shape index: {}]
  %s5 = inlined_call_operand.vmem [shape: bf16[128,32], index: 5, kind: input, shape index: {}]
  %s6 = inlined_call_operand.vmem [shape: f32[8,128], index: 6, kind: input, shape index: {}]
  %s7 = inlined_call_operand.hbm [shape: f32[16,32], index: 7, kind: output, shape index: {}]
  %s8 = sld [smem:[#allocation0]]
  $region42: #{tpu_custom_call.1} parent=0
    _
  %s10 = ssub.s32 1, %s8
  %s11 = scalar_select 0, %s10, %s8
  $region1: #{tpu_custom_call.1} parent=0
    #allocation2 [shape = 'u8[512]{0}', space=smem, size = 0x200, scoped, tag = 'input window, operand 0, single buffered']
    #allocation3 [shape = 's32[1]{0}', space=sflag, size = 0x4, scoped, tag = 'scoped memory for tpu_custom_call.1']
    #allocation4 [shape = 's32[1]{0}', space=sflag, size = 0x4, scoped, tag = 'scoped memory for tpu_custom_call.1']
    #allocation5 [shape = 'u8[8192]{0}', space=vmem, size = 0x2000, scoped, tag = 'output window, operand 0, single buffered']
    %12 = vsyncpa [#allocation4], 0
    %13 = vsyncpa [#allocation3], 0
    // Predicated region
    $region2: #{tpu_custom_call.1} parent=1 // pred_check
      _
    $region3: #{tpu_custom_call.1} parent=1 // pred_check_branch
      %15 = sbr.rel (0) target = $region5
    $region4: #{tpu_custom_call.1} parent=1 // pred_region
      %s17 = ssub.s32 16, 16
      %18 = vsyncadd [#allocation4], %s17
      %s20 = sshll.u32 %s0, 4
      %s21 = int_to_ptr.vmem [resolvable:$true] %s20
      %23 = dma.vmem_to_smem %s21, 16, [#allocation2], [#allocation4]
    $region5: #{tpu_custom_call.1} parent=1 // pred_fallthru
      _
    // Predicated region
    $region6: #{tpu_custom_call.1} parent=1 // pred_check
      _
    $region7: #{tpu_custom_call.1} parent=1 // pred_check_branch
      %25 = sbr.rel (0) target = $region9
    $region8: #{tpu_custom_call.1} parent=1 // pred_region
      _
    $region9: #{tpu_custom_call.1} parent=1 // pred_fallthru
      _
    // Predicated region
    $region10: #{tpu_custom_call.1} parent=1 // pred_check
      _
    $region11: #{tpu_custom_call.1} parent=1 // pred_check_branch
      %27 = sbr.rel (0) target = $region13
    $region12: #{tpu_custom_call.1} parent=1 // pred_region
      _
    $region13: #{tpu_custom_call.1} parent=1 // pred_fallthru
      _
    // Predicated region
    $region14: #{tpu_custom_call.1} parent=1 // pred_check
      _
    $region15: #{tpu_custom_call.1} parent=1 // pred_check_branch
      %29 = sbr.rel (0) target = $region17
    $region16: #{tpu_custom_call.1} parent=1 // pred_region
      _
    $region17: #{tpu_custom_call.1} parent=1 // pred_fallthru
      _
    // Predicated region
    $region18: #{tpu_custom_call.1} parent=1 // pred_check
      _
    $region19: #{tpu_custom_call.1} parent=1 // pred_check_branch
      %31 = sbr.rel (0) target = $region21
    $region20: #{tpu_custom_call.1} parent=1 // pred_region
      _
    $region21: #{tpu_custom_call.1} parent=1 // pred_fallthru
      _
    // Predicated region
    $region22: #{tpu_custom_call.1} parent=1 // pred_check
      _
    $region23: #{tpu_custom_call.1} parent=1 // pred_check_branch
      %33 = sbr.rel (0) target = $region25
    $region24: #{tpu_custom_call.1} parent=1 // pred_region
      _
    $region25: #{tpu_custom_call.1} parent=1 // pred_fallthru
      _
    // Predicated region
    $region26: #{tpu_custom_call.1} parent=1 // pred_check
      _
    $region27: #{tpu_custom_call.1} parent=1 // pred_check_branch
      %35 = sbr.rel (0) target = $region29
    $region28: #{tpu_custom_call.1} parent=1 // pred_region
      _
    $region29: #{tpu_custom_call.1} parent=1 // pred_fallthru
      _
    // Predicated region
    $region30: #{tpu_custom_call.1} parent=1 // pred_check
      _
    $region31: #{tpu_custom_call.1} parent=1 // pred_check_branch
      %37 = sbr.rel (0) target = $region33
    $region32: #{tpu_custom_call.1} parent=1 // pred_region
      %38 = dma.done [#allocation4], 16
    $region33: #{tpu_custom_call.1} parent=1 // pred_fallthru
      _
    %39 = sfence
    %v41 = vld [vmem:[%s1] sm:$0xff]
    %v42 = vld [vmem:[%s1 + $0x8] sm:$0xff]
    %v43 = vld [vmem:[%s6] sm:$0x1]
    %v44 = vld [vmem:[%s6 + $0x1] sm:$0x1]
    %v45 = vld [vmem:[%s6 + $0x2] sm:$0x1]
    %v46 = vld [vmem:[%s6 + $0x3] sm:$0x1]
    %v47 = vld [vmem:[%s6 + $0x4] sm:$0x1]
    %v48 = vld [vmem:[%s6 + $0x5] sm:$0x1]
    %v49 = vld [vmem:[%s6 + $0x6] sm:$0x1]
    %vm50 = vcmask 261120
    %v51 = vsel %vm50, %v41, 0.0
    %52 = vadd.xlane.f32.xlu0 %v51
    %v53 = vpop.xlane.xlu0 %52
    %v54 = vsel %vm50, %v42, 0.0
    %55 = vadd.xlane.f32.xlu0 %v54
    %v56 = vpop.xlane.xlu0 %55
    %v57 = vrcp.pop 32.0
    %v58 = vmul.f32 %v53, %v57
    %v59 = vmul.f32 %v56, %v57
    %v60 = vsub.f32 %v41, %v58
    %v61 = vsub.f32 %v42, %v59
    %v62 = vmul.f32 %v60, %v60
    %v63 = vmul.f32 %v61, %v61
    %v64 = vsel %vm50, %v62, 0.0
    %65 = vadd.xlane.f32.xlu0 %v64
    %v66 = vpop.xlane.xlu0 %65
    %v67 = vsel %vm50, %v63, 0.0
    %68 = vadd.xlane.f32.xlu0 %v67
    %v69 = vpop.xlane.xlu0 %68
    %v70 = vmul.f32 %v66, %v57
    %v71 = vmul.f32 %v69, %v57
    %v72 = vadd.f32 %v70, 1e-05
    %v73 = vadd.f32 %v71, 1e-05
    %v74 = vrsqrt.pop %v72
    %v75 = vrsqrt.pop %v73
    %v76 = vmul.f32 %v60, %v74
    %v77 = vmul.f32 %v61, %v75
    %v78 = vlaneseq
    %v79 = vshrl.u32 %v78, 7
    %v80 = vsub.s32 0, %v79
    %v81 = vrot.slane %v43, %v80
    %v82 = vmul.f32 %v76, %v81
    %v83 = vmul.f32 %v77, %v81
    %v84 = vlaneseq
    %v85 = vshrl.u32 %v84, 7
    %v86 = vsub.s32 0, %v85
    %v87 = vrot.slane %v44, %v86
    %v88 = vadd.f32 %v82, %v87
    %v89 = vadd.f32 %v83, %v87
    %v90 = vpack.c.bf16 %v89, %v88
    %v91 = vld [vmem:[%s2] sm:$0xf]
    %v92 = vld [vmem:[%s2 + $0x4] sm:$0xf]
    %v93 = vld [vmem:[%s2 + $0x8] sm:$0xf]
    %v94 = vld [vmem:[%s2 + $0xc] sm:$0xf]
    %v99 = vunpack.c.l.b16 %v91
    %v100 = vunpack.c.l.b16 %v92
    %v101 = vunpack.c.l.b16 %v93
    %v102 = vunpack.c.l.b16 %v94
    %v103 = vpack.c.b16 %v100, %v99
    %v104 = vpack.c.b16 %v102, %v101
    %v108 = vsel %vm50, %v90, 0
    %110 = vmatprep.subr.bf16.mxu0 0
    %111 = vmatpush1.bf16.msra.mxu0 0
    %112 = vmatprep.subr.bf16.mxu0 0
    %113 = vmatpush1.bf16.msra.mxu0 0
    %114 = vmatprep.subr.bf16.mxu0 0
    %115 = vmatpush1.bf16.msra.mxu0 0
    %116 = vmatprep.subr.bf16.mxu0 0
    %117 = vmatpush1.bf16.msra.mxu0 0
    %118 = vmatprep.subr.bf16.mxu0 0
    %119 = vmatpush1.bf16.msra.mxu0 0
    %120 = vmatprep.subr.bf16.mxu0 0
    %121 = vmatpush1.bf16.msra.mxu0 0
    %122 = vmatprep.subr.bf16.mxu0 0
    %123 = vmatpush1.bf16.msra.mxu0 %v104
    %124 = vmatprep.subr.bf16.mxu0 0
    %125 = vmatpush1.bf16.msra.mxu0 %v103
    %126 = vmatprep.subr.bf16.mxu0 0
    %127 = vmatpush2.bf16.msra.mxu0 0
    %128 = vmatprep.subr.bf16.mxu0 0
    %129 = vmatpush2.bf16.msra.mxu0 0
    %130 = vmatprep.subr.bf16.mxu0 0
    %131 = vmatpush2.bf16.msra.mxu0 0
    %132 = vmatprep.subr.bf16.mxu0 0
    %133 = vmatpush2.bf16.msra.mxu0 0
    %134 = vmatprep.subr.bf16.mxu0 0
    %135 = vmatpush2.bf16.msra.mxu0 0
    %136 = vmatprep.subr.bf16.mxu0 0
    %137 = vmatpush2.bf16.msra.mxu0 0
    %138 = vmatprep.subr.bf16.mxu0 0
    %139 = vmatpush2.bf16.msra.mxu0 0
    %140 = vmatprep.subr.bf16.mxu0 0
    %141 = vmatpush2.bf16.msra.mxu0 0
    %142 = vmatprep.mubr.bf16.mxu0 0
    %143 = vmatmul.mubr.bf16.gmra.mxu0 %v108
    %v144 = vpop.f32.mrf.mxu0
    %v145 = vadd.f32 0.0, %v144
    %v146 = vpop.f32.mrf.mxu0
    %v147 = vpop.f32.mrf.mxu0
    %v148 = vadd.f32 0.0, %v147
    %v149 = vpop.f32.mrf.mxu0
    %150 = vdwg.mxu0
    %v151 = vlaneseq
    %v152 = vshrl.u32 %v151, 7
    %v153 = vadd.s32 %v152, 8
    %v154 = vadd.s32 %v152, 16
    %v155 = vadd.s32 %v152, 24
    %v156 = vadd.s32 %v152, 32
    %v157 = vadd.s32 %v152, 40
    %v158 = vadd.s32 %v152, 48
    %v159 = vadd.s32 %v152, 56
    %v160 = vlaneseq
    %v161 = vand.u32 %v160, 127
    %v162 = vshrl.u32 %v152, 4
    %v163 = vshrl.u32 %v153, 4
    %v164 = vshrl.u32 %v154, 4
    %v165 = vshrl.u32 %v155, 4
    %v166 = vshrl.u32 %v156, 4
    %v167 = vshrl.u32 %v157, 4
    %v168 = vshrl.u32 %v158, 4
    %v169 = vshrl.u32 %v159, 4
    %v170 = vshrl.u32 %v161, 3
    %vm171 = vcmp.eq.s32.totalorder %v162, %v170
    %vm172 = vcmp.eq.s32.totalorder %v163, %v170
    %vm173 = vcmp.eq.s32.totalorder %v164, %v170
    %vm174 = vcmp.eq.s32.totalorder %v165, %v170
    %vm175 = vcmp.eq.s32.totalorder %v166, %v170
    %vm176 = vcmp.eq.s32.totalorder %v167, %v170
    %vm177 = vcmp.eq.s32.totalorder %v168, %v170
    %vm178 = vcmp.eq.s32.totalorder %v169, %v170
    %v179 = vsel %vm171, 1, 0
    %v180 = vsel %vm172, 1, 0
    %v181 = vsel %vm173, 1, 0
    %v182 = vsel %vm174, 1, 0
    %v183 = vsel %vm175, 1, 0
    %v184 = vsel %vm176, 1, 0
    %v185 = vsel %vm177, 1, 0
    %v186 = vsel %vm178, 1, 0
    %v187 = vcvt.s32.f32 %v179
    %v188 = vcvt.s32.f32 %v180
    %v189 = vcvt.s32.f32 %v181
    %v190 = vcvt.s32.f32 %v182
    %v191 = vcvt.s32.f32 %v183
    %v192 = vcvt.s32.f32 %v184
    %v193 = vcvt.s32.f32 %v185
    %v194 = vcvt.s32.f32 %v186
    %203 = vrot.lane.b32.xlu0 %v187, 32
    %v204 = vpop.permute.xlu0 %203
    %205 = vrot.lane.b32.xlu0 %v188, 32
    %v206 = vpop.permute.xlu0 %205
    %207 = vrot.lane.b32.xlu0 %v189, 32
    %v208 = vpop.permute.xlu0 %207
    %209 = vrot.lane.b32.xlu0 %v190, 32
    %v210 = vpop.permute.xlu0 %209
    %211 = vrot.lane.b32.xlu0 %v191, 32
    %v212 = vpop.permute.xlu0 %211
    %213 = vrot.lane.b32.xlu0 %v192, 32
    %v214 = vpop.permute.xlu0 %213
    %215 = vrot.lane.b32.xlu0 %v193, 32
    %v216 = vpop.permute.xlu0 %215
    %217 = vrot.lane.b32.xlu0 %v194, 32
    %v218 = vpop.permute.xlu0 %217
    %v227 = vmul.f32 %v145, %v204
    %v228 = vmul.f32 %v148, %v206
    %v229 = vmul.f32 %v145, %v208
    %v230 = vmul.f32 %v148, %v210
    %v231 = vmul.f32 %v145, %v212
    %v232 = vmul.f32 %v148, %v214
    %v233 = vmul.f32 %v145, %v216
    %v234 = vmul.f32 %v148, %v218
    %v235 = vpack.c.bf16 %v228, %v227
    %v236 = vpack.c.bf16 %v230, %v229
    %v237 = vpack.c.bf16 %v232, %v231
    %v238 = vpack.c.bf16 %v234, %v233
    %239 = vrot.lane.b32.xlu0 %v187, 64
    %v240 = vpop.permute.xlu0 %239
    %241 = vrot.lane.b32.xlu0 %v188, 64
    %v242 = vpop.permute.xlu0 %241
    %243 = vrot.lane.b32.xlu0 %v189, 64
    %v244 = vpop.permute.xlu0 %243
    %245 = vrot.lane.b32.xlu0 %v190, 64
    %v246 = vpop.permute.xlu0 %245
    %247 = vrot.lane.b32.xlu0 %v191, 64
    %v248 = vpop.permute.xlu0 %247
    %249 = vrot.lane.b32.xlu0 %v192, 64
    %v250 = vpop.permute.xlu0 %249
    %251 = vrot.lane.b32.xlu0 %v193, 64
    %v252 = vpop.permute.xlu0 %251
    %253 = vrot.lane.b32.xlu0 %v194, 64
    %v254 = vpop.permute.xlu0 %253
    %v263 = vmul.f32 %v145, %v240
    %v264 = vmul.f32 %v148, %v242
    %v265 = vmul.f32 %v145, %v244
    %v266 = vmul.f32 %v148, %v246
    %v267 = vmul.f32 %v145, %v248
    %v268 = vmul.f32 %v148, %v250
    %v269 = vmul.f32 %v145, %v252
    %v270 = vmul.f32 %v148, %v254
    %v271 = vpack.c.bf16 %v264, %v263
    %v272 = vpack.c.bf16 %v266, %v265
    %v273 = vpack.c.bf16 %v268, %v267
    %v274 = vpack.c.bf16 %v270, %v269
    %v275 = vpack.c.bf16 %v188, %v187
    %v276 = vpack.c.bf16 %v190, %v189
    %v277 = vpack.c.bf16 %v192, %v191
    %v278 = vpack.c.bf16 %v194, %v193
    %v279 = vpack.c.bf16 %v148, %v145
    %284 = vrot.lane.b32.xlu0 %v235, 96
    %v285 = vpop.permute.xlu0 %284
    %286 = vrot.lane.b32.xlu0 %v236, 96
    %v287 = vpop.permute.xlu0 %286
    %288 = vrot.lane.b32.xlu0 %v237, 96
    %v289 = vpop.permute.xlu0 %288
    %290 = vrot.lane.b32.xlu0 %v238, 96
    %v291 = vpop.permute.xlu0 %290
    %v293 = vsel %vm50, %v279, 0
    %v296 = vsel %vm50, %v285, 0
    %v299 = vsel %vm50, %v287, 0
    %v302 = vsel %vm50, %v289, 0
    %v305 = vsel %vm50, %v291, 0
    %307 = vmatprep.subr.bf16.mxu0 0
    %308 = vmatpush1.bf16.xpose.msra.mxu0 0
    %309 = vmatprep.subr.bf16.mxu0 0
    %310 = vmatpush1.bf16.xpose.msra.mxu0 0
    %311 = vmatprep.subr.bf16.mxu0 0
    %312 = vmatpush1.bf16.xpose.msra.mxu0 0
    %313 = vmatprep.subr.bf16.mxu0 0
    %314 = vmatpush1.bf16.xpose.msra.mxu0 0
    %315 = vmatprep.subr.bf16.mxu0 0
    %316 = vmatpush1.bf16.xpose.msra.mxu0 %v305
    %317 = vmatprep.subr.bf16.mxu0 0
    %318 = vmatpush1.bf16.xpose.msra.mxu0 %v302
    %319 = vmatprep.subr.bf16.mxu0 0
    %320 = vmatpush1.bf16.xpose.msra.mxu0 %v299
    %321 = vmatprep.subr.bf16.mxu0 0
    %322 = vmatpush1.bf16.xpose.msra.mxu0 %v296
    %323 = vmatprep.subr.bf16.mxu0 0
    %324 = vmatpush2.bf16.xpose.msra.mxu0 0
    %325 = vmatprep.subr.bf16.mxu0 0
    %326 = vmatpush2.bf16.xpose.msra.mxu0 0
    %327 = vmatprep.subr.bf16.mxu0 0
    %328 = vmatpush2.bf16.xpose.msra.mxu0 0
    %329 = vmatprep.subr.bf16.mxu0 0
    %330 = vmatpush2.bf16.xpose.msra.mxu0 0
    %331 = vmatprep.subr.bf16.mxu0 0
    %332 = vmatpush2.bf16.xpose.msra.mxu0 0
    %333 = vmatprep.subr.bf16.mxu0 0
    %334 = vmatpush2.bf16.xpose.msra.mxu0 0
    %335 = vmatprep.subr.bf16.mxu0 0
    %336 = vmatpush2.bf16.xpose.msra.mxu0 0
    %337 = vmatprep.subr.bf16.mxu0 0
    %338 = vmatpush2.bf16.xpose.msra.mxu0 0
    %339 = vmatprep.mubr.bf16.mxu0 0
    %340 = vmatmul.mubr.bf16.gmra.mxu0 %v293
    %v341 = vpop.f32.mrf.mxu0
    %v342 = vadd.f32 0.0, %v341
    %v343 = vpop.f32.mrf.mxu0
    %v344 = vpop.f32.mrf.mxu0
    %v345 = vadd.f32 0.0, %v344
    %v346 = vpop.f32.mrf.mxu0
    %347 = vdwg.mxu0
    %v348 = vand.u32 %v152, 7
    %v349 = vand.u32 %v153, 7
    %v350 = vshrl.u32 %v152, 3
    %v351 = vshrl.u32 %v153, 3
    %v352 = vand.u32 %v161, 7
    %v353 = vand.u32 %v170, 1
    %vm354 = vcmp.eq.s32.totalorder %v350, 0
    %vm355 = vcmp.eq.s32.totalorder %v351, 0
    %s356 = sld [smem:[#allocation2]]
    %v357 = vstv %s356
    %v358 = vsel %vm354, %v357, 0
    %v359 = vsel %vm355, %v357, 0
    %vm360 = vcmp.eq.s32.totalorder %v350, 1
    %vm361 = vcmp.eq.s32.totalorder %v351, 1
    %s362 = sld [smem:[#allocation2 + $0x1]]
    %v363 = vstv %s362
    %v364 = vsel %vm360, %v363, %v358
    %v365 = vsel %vm361, %v363, %v359
    %vm366 = vcmp.eq.s32.totalorder %v353, %v350
    %vm367 = vcmp.eq.s32.totalorder %v353, %v351
    %vm368 = vcmp.le.s32.totalorder %v352, %v348
    %vm369 = vcmp.le.s32.totalorder %v352, %v349
    %vm370 = vcmp.lt.s32.totalorder %v348, %v364
    %vm371 = vcmp.lt.s32.totalorder %v349, %v365
    %vm372 = vmand %vm368, %vm370
    %vm373 = vmand %vm369, %vm371
    %vm374 = vcmp.lt.s32.totalorder %v352, %v364
    %vm375 = vcmp.lt.s32.totalorder %v352, %v365
    %vm376 = vmand %vm372, %vm374
    %vm377 = vmand %vm373, %vm375
    %vm378 = vcmp.eq.s32.totalorder %v352, %v348
    %vm379 = vcmp.eq.s32.totalorder %v352, %v349
    %vm380 = vmor %vm376, %vm378
    %vm381 = vmor %vm377, %vm379
    %vm382 = vmand %vm366, %vm380
    %vm383 = vmand %vm367, %vm381
    %v384 = vsel %vm382, %v342, -inf
    %v385 = vsel %vm383, %v345, -inf
    %vm386 = vcmask 523264
    %v387 = vsel %vm386, %v384, -inf
    %388 = vmax.xlane.f32.xlu0 %v387
    %v389 = vpop.xlane.xlu0 %388
    %v390 = vsel %vm386, %v385, -inf
    %391 = vmax.xlane.f32.xlu0 %v390
    %v392 = vpop.xlane.xlu0 %391
    %v393 = vsub.f32 %v384, %v389
    %v394 = vsub.f32 %v385, %v392
    %v395 = vmul.f32 %v393, 1.442695
    %v396 = vpow.pop %v395
    %v397 = vmul.f32 %v394, 1.442695
    %v398 = vpow.pop %v397
    %v399 = vpack.c.bf16 %v398, %v396
    %v401 = vsel %vm386, %v399, 0
    %403 = vmatprep.subr.bf16.mxu0 0
    %404 = vmatpush1.bf16.msra.mxu0 0
    %405 = vmatprep.subr.bf16.mxu0 0
    %406 = vmatpush1.bf16.msra.mxu0 0
    %407 = vmatprep.subr.bf16.mxu0 0
    %408 = vmatpush1.bf16.msra.mxu0 0
    %409 = vmatprep.subr.bf16.mxu0 0
    %410 = vmatpush1.bf16.msra.mxu0 0
    %411 = vmatprep.subr.bf16.mxu0 0
    %412 = vmatpush1.bf16.msra.mxu0 %v278
    %413 = vmatprep.subr.bf16.mxu0 0
    %414 = vmatpush1.bf16.msra.mxu0 %v277
    %415 = vmatprep.subr.bf16.mxu0 0
    %416 = vmatpush1.bf16.msra.mxu0 %v276
    %417 = vmatprep.subr.bf16.mxu0 0
    %418 = vmatpush1.bf16.msra.mxu0 %v275
    %419 = vmatprep.subr.bf16.mxu0 0
    %420 = vmatpush2.bf16.msra.mxu0 0
    %421 = vmatprep.subr.bf16.mxu0 0
    %422 = vmatpush2.bf16.msra.mxu0 0
    %423 = vmatprep.subr.bf16.mxu0 0
    %424 = vmatpush2.bf16.msra.mxu0 0
    %425 = vmatprep.subr.bf16.mxu0 0
    %426 = vmatpush2.bf16.msra.mxu0 0
    %427 = vmatprep.subr.bf16.mxu0 0
    %428 = vmatpush2.bf16.msra.mxu0 0
    %429 = vmatprep.subr.bf16.mxu0 0
    %430 = vmatpush2.bf16.msra.mxu0 0
    %431 = vmatprep.subr.bf16.mxu0 0
    %432 = vmatpush2.bf16.msra.mxu0 0
    %433 = vmatprep.subr.bf16.mxu0 0
    %434 = vmatpush2.bf16.msra.mxu0 0
    %435 = vmatprep.mubr.bf16.mxu0 0
    %436 = vmatmul.mubr.bf16.gmra.mxu0 %v401
    %v437 = vpop.f32.mrf.mxu0
    %v438 = vadd.f32 0.0, %v437
    %v439 = vpop.f32.mrf.mxu0
    %v440 = vpop.f32.mrf.mxu0
    %v441 = vadd.f32 0.0, %v440
    %v442 = vpop.f32.mrf.mxu0
    %443 = vdwg.mxu0
    %448 = vrot.lane.b32.xlu0 %v271, 64
    %v449 = vpop.permute.xlu0 %448
    %450 = vrot.lane.b32.xlu0 %v272, 64
    %v451 = vpop.permute.xlu0 %450
    %452 = vrot.lane.b32.xlu0 %v273, 64
    %v453 = vpop.permute.xlu0 %452
    %454 = vrot.lane.b32.xlu0 %v274, 64
    %v455 = vpop.permute.xlu0 %454
    %460 = vmatprep.subr.bf16.mxu0 0
    %461 = vmatpush1.bf16.msra.mxu0 0
    %462 = vmatprep.subr.bf16.mxu0 0
    %463 = vmatpush1.bf16.msra.mxu0 0
    %464 = vmatprep.subr.bf16.mxu0 0
    %465 = vmatpush1.bf16.msra.mxu0 0
    %466 = vmatprep.subr.bf16.mxu0 0
    %467 = vmatpush1.bf16.msra.mxu0 0
    %468 = vmatprep.subr.bf16.mxu0 0
    %469 = vmatpush1.bf16.msra.mxu0 %v455
    %470 = vmatprep.subr.bf16.mxu0 0
    %471 = vmatpush1.bf16.msra.mxu0 %v453
    %472 = vmatprep.subr.bf16.mxu0 0
    %473 = vmatpush1.bf16.msra.mxu0 %v451
    %474 = vmatprep.subr.bf16.mxu0 0
    %475 = vmatpush1.bf16.msra.mxu0 %v449
    %476 = vmatprep.subr.bf16.mxu0 0
    %477 = vmatpush2.bf16.msra.mxu0 0
    %478 = vmatprep.subr.bf16.mxu0 0
    %479 = vmatpush2.bf16.msra.mxu0 0
    %480 = vmatprep.subr.bf16.mxu0 0
    %481 = vmatpush2.bf16.msra.mxu0 0
    %482 = vmatprep.subr.bf16.mxu0 0
    %483 = vmatpush2.bf16.msra.mxu0 0
    %484 = vmatprep.subr.bf16.mxu0 0
    %485 = vmatpush2.bf16.msra.mxu0 0
    %486 = vmatprep.subr.bf16.mxu0 0
    %487 = vmatpush2.bf16.msra.mxu0 0
    %488 = vmatprep.subr.bf16.mxu0 0
    %489 = vmatpush2.bf16.msra.mxu0 0
    %490 = vmatprep.subr.bf16.mxu0 0
    %491 = vmatpush2.bf16.msra.mxu0 0
    %492 = vmatprep.mubr.bf16.mxu0 0
    %493 = vmatmul.mubr.bf16.gmra.mxu0 %v401
    %v494 = vpop.f32.mrf.mxu0
    %v495 = vadd.f32 0.0, %v494
    %v496 = vpop.f32.mrf.mxu0
    %v497 = vpop.f32.mrf.mxu0
    %v498 = vadd.f32 0.0, %v497
    %v499 = vpop.f32.mrf.mxu0
    %500 = vdwg.mxu0
    %v501 = vrcp.pop %v438
    %v502 = vrcp.pop %v441
    %v503 = vmul.f32 %v495, %v501
    %v504 = vmul.f32 %v498, %v502
    %v505 = vpack.c.bf16 %v504, %v503
    %v506 = vld [vmem:[%s3] sm:$0xf]
    %v507 = vld [vmem:[%s3 + $0x4] sm:$0xf]
    %v508 = vld [vmem:[%s3 + $0x8] sm:$0xf]
    %v509 = vld [vmem:[%s3 + $0xc] sm:$0xf]
    %v510 = vlaneseq
    %v511 = vshrl.u32 %v510, 7
    %v512 = vsub.s32 0, %v511
    %v513 = vrot.slane %v45, %v512
    %v518 = vunpack.c.l.b16 %v506
    %v519 = vunpack.c.l.b16 %v507
    %v520 = vunpack.c.l.b16 %v508
    %v521 = vunpack.c.l.b16 %v509
    %v522 = vpack.c.b16 %v519, %v518
    %v523 = vpack.c.b16 %v521, %v520
    %v527 = vsel %vm50, %v505, 0
    %529 = vmatprep.subr.bf16.mxu0 0
    %530 = vmatpush1.bf16.msra.mxu0 0
    %531 = vmatprep.subr.bf16.mxu0 0
    %532 = vmatpush1.bf16.msra.mxu0 0
    %533 = vmatprep.subr.bf16.mxu0 0
    %534 = vmatpush1.bf16.msra.mxu0 0
    %535 = vmatprep.subr.bf16.mxu0 0
    %536 = vmatpush1.bf16.msra.mxu0 0
    %537 = vmatprep.subr.bf16.mxu0 0
    %538 = vmatpush1.bf16.msra.mxu0 0
    %539 = vmatprep.subr.bf16.mxu0 0
    %540 = vmatpush1.bf16.msra.mxu0 0
    %541 = vmatprep.subr.bf16.mxu0 0
    %542 = vmatpush1.bf16.msra.mxu0 %v523
    %543 = vmatprep.subr.bf16.mxu0 0
    %544 = vmatpush1.bf16.msra.mxu0 %v522
    %545 = vmatprep.subr.bf16.mxu0 0
    %546 = vmatpush2.bf16.msra.mxu0 0
    %547 = vmatprep.subr.bf16.mxu0 0
    %548 = vmatpush2.bf16.msra.mxu0 0
    %549 = vmatprep.subr.bf16.mxu0 0
    %550 = vmatpush2.bf16.msra.mxu0 0
    %551 = vmatprep.subr.bf16.mxu0 0
    %552 = vmatpush2.bf16.msra.mxu0 0
    %553 = vmatprep.subr.bf16.mxu0 0
    %554 = vmatpush2.bf16.msra.mxu0 0
    %555 = vmatprep.subr.bf16.mxu0 0
    %556 = vmatpush2.bf16.msra.mxu0 0
    %557 = vmatprep.subr.bf16.mxu0 0
    %558 = vmatpush2.bf16.msra.mxu0 0
    %559 = vmatprep.subr.bf16.mxu0 0
    %560 = vmatpush2.bf16.msra.mxu0 0
    %561 = vmatprep.mubr.bf16.mxu0 0
    %562 = vmatmul.mubr.bf16.gmra.mxu0 %v527
    %v563 = vpop.f32.mrf.mxu0
    %v564 = vadd.f32 %v513, %v563
    %v565 = vpop.f32.mrf.mxu0
    %v566 = vpop.f32.mrf.mxu0
    %v567 = vadd.f32 %v513, %v566
    %v568 = vpop.f32.mrf.mxu0
    %569 = vdwg.mxu0
    %v570 = vadd.f32 %v41, %v564
    %v571 = vadd.f32 %v42, %v567
    %v572 = vsel %vm50, %v570, 0.0
    %573 = vadd.xlane.f32.xlu0 %v572
    %v574 = vpop.xlane.xlu0 %573
    %v575 = vsel %vm50, %v571, 0.0
    %576 = vadd.xlane.f32.xlu0 %v575
    %v577 = vpop.xlane.xlu0 %576
    %v578 = vmul.f32 %v574, %v57
    %v579 = vmul.f32 %v577, %v57
    %v580 = vsub.f32 %v570, %v578
    %v581 = vsub.f32 %v571, %v579
    %v582 = vmul.f32 %v580, %v580
    %v583 = vmul.f32 %v581, %v581
    %v584 = vsel %vm50, %v582, 0.0
    %585 = vadd.xlane.f32.xlu0 %v584
    %v586 = vpop.xlane.xlu0 %585
    %v587 = vsel %vm50, %v583, 0.0
    %588 = vadd.xlane.f32.xlu0 %v587
    %v589 = vpop.xlane.xlu0 %588
    %v590 = vmul.f32 %v586, %v57
    %v591 = vmul.f32 %v589, %v57
    %v592 = vadd.f32 %v590, 1e-05
    %v593 = vadd.f32 %v591, 1e-05
    %v594 = vrsqrt.pop %v592
    %v595 = vrsqrt.pop %v593
    %v596 = vmul.f32 %v580, %v594
    %v597 = vmul.f32 %v581, %v595
    %v598 = vlaneseq
    %v599 = vshrl.u32 %v598, 7
    %v600 = vsub.s32 0, %v599
    %v601 = vrot.slane %v46, %v600
    %v602 = vmul.f32 %v596, %v601
    %v603 = vmul.f32 %v597, %v601
    %v604 = vlaneseq
    %v605 = vshrl.u32 %v604, 7
    %v606 = vsub.s32 0, %v605
    %v607 = vrot.slane %v47, %v606
    %v608 = vadd.f32 %v602, %v607
    %v609 = vadd.f32 %v603, %v607
    %v610 = vpack.c.bf16 %v609, %v608
    %v611 = vld [vmem:[%s4] sm:$0xf]
    %v612 = vld [vmem:[%s4 + $0x4] sm:$0xf]
    %v613 = vld [vmem:[%s4 + $0x8] sm:$0xf]
    %v614 = vld [vmem:[%s4 + $0xc] sm:$0xf]
    %v615 = vlaneseq
    %v616 = vshrl.u32 %v615, 7
    %v617 = vsub.s32 0, %v616
    %v618 = vrot.slane %v49, %v617
    %v623 = vunpack.c.l.b16 %v611
    %v624 = vunpack.c.l.b16 %v612
    %v625 = vunpack.c.l.b16 %v613
    %v626 = vunpack.c.l.b16 %v614
    %v627 = vpack.c.b16 %v624, %v623
    %v628 = vpack.c.b16 %v626, %v625
    %v632 = vsel %vm50, %v610, 0
    %634 = vmatprep.subr.bf16.mxu0 0
    %635 = vmatpush1.bf16.msra.mxu0 0
    %636 = vmatprep.subr.bf16.mxu0 0
    %637 = vmatpush1.bf16.msra.mxu0 0
    %638 = vmatprep.subr.bf16.mxu0 0
    %639 = vmatpush1.bf16.msra.mxu0 0
    %640 = vmatprep.subr.bf16.mxu0 0
    %641 = vmatpush1.bf16.msra.mxu0 0
    %642 = vmatprep.subr.bf16.mxu0 0
    %643 = vmatpush1.bf16.msra.mxu0 0
    %644 = vmatprep.subr.bf16.mxu0 0
    %645 = vmatpush1.bf16.msra.mxu0 0
    %646 = vmatprep.subr.bf16.mxu0 0
    %647 = vmatpush1.bf16.msra.mxu0 %v628
    %648 = vmatprep.subr.bf16.mxu0 0
    %649 = vmatpush1.bf16.msra.mxu0 %v627
    %650 = vmatprep.subr.bf16.mxu0 0
    %651 = vmatpush2.bf16.msra.mxu0 0
    %652 = vmatprep.subr.bf16.mxu0 0
    %653 = vmatpush2.bf16.msra.mxu0 0
    %654 = vmatprep.subr.bf16.mxu0 0
    %655 = vmatpush2.bf16.msra.mxu0 0
    %656 = vmatprep.subr.bf16.mxu0 0
    %657 = vmatpush2.bf16.msra.mxu0 0
    %658 = vmatprep.subr.bf16.mxu0 0
    %659 = vmatpush2.bf16.msra.mxu0 0
    %660 = vmatprep.subr.bf16.mxu0 0
    %661 = vmatpush2.bf16.msra.mxu0 0
    %662 = vmatprep.subr.bf16.mxu0 0
    %663 = vmatpush2.bf16.msra.mxu0 0
    %664 = vmatprep.subr.bf16.mxu0 0
    %665 = vmatpush2.bf16.msra.mxu0 0
    %666 = vmatprep.mubr.bf16.mxu0 0
    %667 = vmatmul.mubr.bf16.gmra.mxu0 %v632
    %v668 = vpop.f32.mrf.mxu0
    %v669 = vadd.f32 %v618, %v668
    %v670 = vpop.f32.mrf.mxu0
    %v671 = vpop.f32.mrf.mxu0
    %v672 = vadd.f32 %v618, %v671
    %v673 = vpop.f32.mrf.mxu0
    %674 = vdwg.mxu0
    %v675 = vmax.f32 %v669, 0.0
    %v676 = vmax.f32 %v672, 0.0
    %v677 = vpack.c.bf16 %v676, %v675
    %v678 = vld [vmem:[%s5] sm:$0xf]
    %v679 = vld [vmem:[%s5 + $0x4] sm:$0xf]
    %v680 = vld [vmem:[%s5 + $0x8] sm:$0xf]
    %v681 = vld [vmem:[%s5 + $0xc] sm:$0xf]
    %v682 = vld [vmem:[%s5 + $0x10] sm:$0xf]
    %v683 = vld [vmem:[%s5 + $0x14] sm:$0xf]
    %v684 = vld [vmem:[%s5 + $0x18] sm:$0xf]
    %v685 = vld [vmem:[%s5 + $0x1c] sm:$0xf]
    %v686 = vld [vmem:[%s5 + $0x20] sm:$0xf]
    %v687 = vld [vmem:[%s5 + $0x24] sm:$0xf]
    %v688 = vld [vmem:[%s5 + $0x28] sm:$0xf]
    %v689 = vld [vmem:[%s5 + $0x2c] sm:$0xf]
    %v690 = vld [vmem:[%s5 + $0x30] sm:$0xf]
    %v691 = vld [vmem:[%s5 + $0x34] sm:$0xf]
    %v692 = vld [vmem:[%s5 + $0x38] sm:$0xf]
    %v693 = vld [vmem:[%s5 + $0x3c] sm:$0xf]
    %v694 = vlaneseq
    %v695 = vshrl.u32 %v694, 7
    %v696 = vsub.s32 0, %v695
    %v697 = vrot.slane %v48, %v696
    %v714 = vunpack.c.l.b16 %v678
    %v715 = vunpack.c.l.b16 %v679
    %v716 = vunpack.c.l.b16 %v680
    %v717 = vunpack.c.l.b16 %v681
    %v718 = vunpack.c.l.b16 %v682
    %v719 = vunpack.c.l.b16 %v683
    %v720 = vunpack.c.l.b16 %v684
    %v721 = vunpack.c.l.b16 %v685
    %v722 = vunpack.c.l.b16 %v686
    %v723 = vunpack.c.l.b16 %v687
    %v724 = vunpack.c.l.b16 %v688
    %v725 = vunpack.c.l.b16 %v689
    %v726 = vunpack.c.l.b16 %v690
    %v727 = vunpack.c.l.b16 %v691
    %v728 = vunpack.c.l.b16 %v692
    %v729 = vunpack.c.l.b16 %v693
    %v730 = vpack.c.b16 %v715, %v714
    %v731 = vpack.c.b16 %v717, %v716
    %v732 = vpack.c.b16 %v719, %v718
    %v733 = vpack.c.b16 %v721, %v720
    %v734 = vpack.c.b16 %v723, %v722
    %v735 = vpack.c.b16 %v725, %v724
    %v736 = vpack.c.b16 %v727, %v726
    %v737 = vpack.c.b16 %v729, %v728
    %746 = vmatprep.subr.bf16.mxu0 0
    %747 = vmatpush1.bf16.msra.mxu0 %v737
    %748 = vmatprep.subr.bf16.mxu0 0
    %749 = vmatpush1.bf16.msra.mxu0 %v736
    %750 = vmatprep.subr.bf16.mxu0 0
    %751 = vmatpush1.bf16.msra.mxu0 %v735
    %752 = vmatprep.subr.bf16.mxu0 0
    %753 = vmatpush1.bf16.msra.mxu0 %v734
    %754 = vmatprep.subr.bf16.mxu0 0
    %755 = vmatpush1.bf16.msra.mxu0 %v733
    %756 = vmatprep.subr.bf16.mxu0 0
    %757 = vmatpush1.bf16.msra.mxu0 %v732
    %758 = vmatprep.subr.bf16.mxu0 0
    %759 = vmatpush1.bf16.msra.mxu0 %v731
    %760 = vmatprep.subr.bf16.mxu0 0
    %761 = vmatpush1.bf16.msra.mxu0 %v730
    %762 = vmatprep.subr.bf16.mxu0 0
    %763 = vmatpush2.bf16.msra.mxu0 0
    %764 = vmatprep.subr.bf16.mxu0 0
    %765 = vmatpush2.bf16.msra.mxu0 0
    %766 = vmatprep.subr.bf16.mxu0 0
    %767 = vmatpush2.bf16.msra.mxu0 0
    %768 = vmatprep.subr.bf16.mxu0 0
    %769 = vmatpush2.bf16.msra.mxu0 0
    %770 = vmatprep.subr.bf16.mxu0 0
    %771 = vmatpush2.bf16.msra.mxu0 0
    %772 = vmatprep.subr.bf16.mxu0 0
    %773 = vmatpush2.bf16.msra.mxu0 0
    %774 = vmatprep.subr.bf16.mxu0 0
    %775 = vmatpush2.bf16.msra.mxu0 0
    %776 = vmatprep.subr.bf16.mxu0 0
    %777 = vmatpush2.bf16.msra.mxu0 0
    %778 = vmatprep.mubr.bf16.mxu0 0
    %779 = vmatmul.mubr.bf16.gmra.mxu0 %v677
    %v780 = vpop.f32.mrf.mxu0
    %v781 = vadd.f32 %v697, %v780
    %v782 = vpop.f32.mrf.mxu0
    %v783 = vpop.f32.mrf.mxu0
    %v784 = vadd.f32 %v697, %v783
    %v785 = vpop.f32.mrf.mxu0
    %786 = vdwg.mxu0
    %v787 = vadd.f32 %v570, %v781
    %v788 = vadd.f32 %v571, %v784
    %789 = vst.msk [vmem:[#allocation5] sm:$0xff] %vm50, %v787
    %790 = vst.msk [vmem:[#allocation5 + $0x8] sm:$0xff] %vm50, %v788
    // Predicated region
    $region34: #{tpu_custom_call.1} parent=1 // pred_check
      _
    $region35: #{tpu_custom_call.1} parent=1 // pred_check_branch
      %792 = sbr.rel (0) target = $region37
    $region36: #{tpu_custom_call.1} parent=1 // pred_region
      %s794 = ssub.s32 256, 256
      %795 = vsyncadd [#allocation3], %s794
      %s796 = sshll.u32 [#allocation5], 4
      %s797 = int_to_ptr.vmem [resolvable:$true] %s796
      %802 = dma.vmem_to_hbm [thread:$0]  %s797, 256, %s7, [#allocation3], 128, 128, 8
    $region37: #{tpu_custom_call.1} parent=1 // pred_fallthru
      _
    // Predicated region
    $region38: #{tpu_custom_call.1} parent=1 // pred_check
      _
    $region39: #{tpu_custom_call.1} parent=1 // pred_check_branch
      %804 = sbr.rel (0) target = $region41
    $region40: #{tpu_custom_call.1} parent=1 // pred_region
      %805 = dma.done [#allocation3], 256
    $region41: #{tpu_custom_call.1} parent=1 // pred_fallthru
      _
    %806 = vsyncpa [#allocation3], 1
    %807 = vsyncpa [#allocation4], 1

</llo_original>
